<compile_context>
chip_gen: v7x
topology: tpu7x:2x2x1
jax: 0.10.0
libtpu: 0.0.40
codegen_flags: <defaults>
</compile_context>

<pallas_src>
import jax
import jax.numpy as jnp
from jax.experimental import pallas as pl
from jax.experimental.pallas import tpu as pltpu


_LANE = 128                               # vreg lane width
_MAX_TILE_ROWS = 8192                     # cap on batch-tile rows
_X_TILE_BYTES_TARGET = 2 * 1024 * 1024    # ~2 MiB per streamed X tile


def _round_up(x, m):
    return (x + m - 1) // m * m


def _pick_batch_tile(B, F):
    """Largest multiple-of-128 row tile keeping the streamed X tile ~2 MiB."""
    rows_for_budget = max(_X_TILE_BYTES_TARGET // (F * 4), _LANE)
    tb = max(_LANE, min(_MAX_TILE_ROWS, (rows_for_budget // _LANE) * _LANE))
    b_pad128 = _round_up(B, _LANE)
    if b_pad128 <= tb:
        return b_pad128                   # single tile covers the whole batch
    return tb


def _predsT(x_ref, wt_ref, bt_ref):
    """preds^T[m, t] = sum_f W[f, m] * X[t, f] + b[m]  ->  (M, TB), batch on lanes."""
    return jnp.einsum('mf,tf->mt', wt_ref[...], x_ref[...],
                      preferred_element_type=jnp.float32) + bt_ref[...]


def _ensemble_mean_kernel(x_ref, wt_ref, bt_ref, mean_ref):
    # x_ref: (TB, F) streamed batch tile; wt_ref: (M, F); bt_ref: (M, 1) resident.
    preds = _predsT(x_ref, wt_ref, bt_ref)
    mean_ref[...] = jnp.mean(preds, axis=0, keepdims=True)        # (1, TB) lane-dense


def _ensemble_std_kernel(x_ref, wt_ref, bt_ref, mean_ref, std_ref):
    preds = _predsT(x_ref, wt_ref, bt_ref)
    m = preds.shape[0]
    mean = jnp.mean(preds, axis=0, keepdims=True)                 # (1, TB)
    # Unbiased (Bessel-corrected) std, matching torch.std_mean(unbiased=True).
    # For M == 1 this is 0/0 -> nan at runtime, same as torch.
    var = jnp.sum((preds - mean) ** 2, axis=0, keepdims=True) / jnp.float32(m - 1)
    mean_ref[...] = mean
    std_ref[...] = jnp.sqrt(var)


def ensemble_forward(X, W, b, return_std=False):
    """Ensemble of linear regressors: preds[:, i] = X @ W[:, i] + b[0, i].

    X: (B, F) f32;  W: (F, M);  b: (1, M).
    Returns mean (B,)              if return_std=False,
            (std (B,), mean (B,))  if return_std=True   (torch.std_mean order).
    """
    X = jnp.asarray(X, jnp.float32)
    W = jnp.asarray(W, jnp.float32)
    b = jnp.asarray(b, jnp.float32).reshape(1, -1)
    B, F = X.shape
    F2, M = W.shape
    assert F == F2 and b.shape == (1, M)

    TB = _pick_batch_tile(B, F)
    B_pad = _round_up(B, TB)
    num_tiles = B_pad // TB
    if B_pad != B:
        # Zero-padded rows produce finite garbage that is sliced off below.
        X = jnp.pad(X, ((0, B_pad - B), (0, 0)))

    Wt = W.T                              # (M, F)  tiny, VMEM-resident
    bt = b.T                              # (M, 1)

    x_spec = pl.BlockSpec((TB, F), lambda i: (i, 0))     # streamed over batch grid
    wt_spec = pl.BlockSpec((M, F), lambda i: (0, 0))     # resident
    bt_spec = pl.BlockSpec((M, 1), lambda i: (0, 0))     # resident
    out_spec = pl.BlockSpec((1, TB), lambda i: (0, i))   # lane-dense output blocks
    out_shape_one = jax.ShapeDtypeStruct((1, B_pad), jnp.float32)

    n_outs = 2 if return_std else 1
    cost = pl.CostEstimate(
        flops=2 * B_pad * F * M + 4 * B_pad * M,
        transcendentals=0,
        bytes_accessed=B_pad * F * 4 + M * F * 4 + M * 4 + n_outs * B_pad * 4,
    )
    params = pltpu.CompilerParams(dimension_semantics=("parallel",))

    if return_std:
        mean, std = pl.pallas_call(
            _ensemble_std_kernel,
            grid=(num_tiles,),
            in_specs=[x_spec, wt_spec, bt_spec],
            out_specs=(out_spec, out_spec),
            out_shape=(out_shape_one, out_shape_one),
            compiler_params=params,
            cost_estimate=cost,
        )(X, Wt, bt)
        return std[0, :B], mean[0, :B]

    mean = pl.pallas_call(
        _ensemble_mean_kernel,
        grid=(num_tiles,),
        in_specs=[x_spec, wt_spec, bt_spec],
        out_specs=out_spec,
        out_shape=out_shape_one,
        compiler_params=params,
        cost_estimate=cost,
    )(X, Wt, bt)
    return mean[0, :B]


if __name__ == "__main__":
    key = jax.random.PRNGKey(0)
    B, F, M = 8, 32, 4                    # batch, features, ensemble members

    kx, kw, kb = jax.random.split(key, 3)
    X = jax.random.normal(kx, (B, F), dtype=jnp.float32)
    W = jax.random.normal(kw, (F, M), dtype=jnp.float32) * 0.1
    b = jax.random.normal(kb, (1, M), dtype=jnp.float32) * 0.1

    # return_std=False path (default forward)
    mean_only = ensemble_forward(X, W, b, return_std=False)
    # return_std=True path
    std, mean = ensemble_forward(X, W, b, return_std=True)
    jax.block_until_ready((mean_only, std, mean))

    # Plain-JAX reference.
    preds_ref = X @ W + b
    mean_ref = preds_ref.mean(axis=1)
    std_ref = jnp.sqrt(((preds_ref - mean_ref[:, None]) ** 2).sum(axis=1) / (M - 1))
    assert jnp.allclose(mean_only, mean_ref, atol=1e-4), "mean mismatch"
    assert jnp.allclose(mean, mean_ref, atol=1e-4), "mean mismatch (std path)"
    assert jnp.allclose(std, std_ref, atol=1e-4), "std mismatch"

    print("KERNEL_OK")
</pallas_src>

<mosaic_0001>
module attributes {stable_mosaic.version = 11 : i64} {
  func.func @_ensemble_mean_kernel(%arg0: i32, %arg1: memref<128x32xf32, #tpu.memory_space<vmem>>, %arg2: memref<4x32xf32, #tpu.memory_space<vmem>>, %arg3: memref<4x1xf32, #tpu.memory_space<vmem>>, %arg4: memref<1x128xf32, #tpu.memory_space<vmem>>) attributes {dimension_semantics = [#tpu.dimension_semantics<parallel>], iteration_bounds = array<i64: 1>, scalar_prefetch = 0 : i64, scratch_operands = 0 : i64, tpu.core_type = #tpu.core_type<tc>, window_params = [{transform_indices = @transform_0, window_bounds = array<i64: 128, 32>}, {pipeline_mode = #tpu.pipeline_mode<synchronous>, transform_indices = @transform_1, window_bounds = array<i64: 4, 32>}, {pipeline_mode = #tpu.pipeline_mode<synchronous>, transform_indices = @transform_2, window_bounds = array<i64: 4, 1>}, {transform_indices = @transform_3, window_bounds = array<i64: 1, 128>}]} {
    %c0 = arith.constant 0 : index
    %c0_0 = arith.constant 0 : index
    %0 = vector.load %arg2[%c0, %c0_0] : memref<4x32xf32, #tpu.memory_space<vmem>>, vector<4x32xf32>
    %c0_1 = arith.constant 0 : index
    %c0_2 = arith.constant 0 : index
    %1 = vector.load %arg1[%c0_1, %c0_2] : memref<128x32xf32, #tpu.memory_space<vmem>>, vector<128x32xf32>
    "tpu.trace_start"() <{level = 10 : i32, message = "mf,tf->mt"}> : () -> ()
    %cst = arith.constant dense<0.000000e+00> : vector<4x128xf32>
    %2 = tpu.matmul %0, %1, %cst {dimension_numbers = #tpu.dot_dimension_numbers<[1], [1], [0], [0], [0, 0, 1, 0], [], []>} : vector<4x32xf32>, vector<128x32xf32>, vector<4x128xf32> -> vector<4x128xf32>
    "tpu.trace_stop"() : () -> ()
    %c0_3 = arith.constant 0 : index
    %c0_4 = arith.constant 0 : index
    %3 = vector.load %arg3[%c0_3, %c0_4] : memref<4x1xf32, #tpu.memory_space<vmem>>, vector<4x1xf32>
    %4 = vector.broadcast %3 : vector<4x1xf32> to vector<4x128xf32>
    %5 = arith.addf %2, %4 : vector<4x128xf32>
    %cst_5 = arith.constant dense<0.000000e+00> : vector<128xf32>
    %6 = vector.multi_reduction <add>, %5, %cst_5 [0] : vector<4x128xf32> to vector<128xf32>
    %7 = vector.shape_cast %6 : vector<128xf32> to vector<1x128xf32>
    %cst_6 = arith.constant 4.000000e+00 : f32
    %8 = vector.broadcast %cst_6 : f32 to vector<1x128xf32>
    %9 = arith.divf %7, %8 : vector<1x128xf32>
    %c0_7 = arith.constant 0 : index
    %c0_8 = arith.constant 0 : index
    %10 = vector.load %arg4[%c0_7, %c0_8] : memref<1x128xf32, #tpu.memory_space<vmem>>, vector<1x128xf32>
    tpu.vector_store %arg4[%c0_7, %c0_8], %9 {strides = array<i32>} : memref<1x128xf32, #tpu.memory_space<vmem>>, vector<1x128xf32>,
    return
  }
  func.func @transform_0(%arg0: i32) -> (i32, i32) {
    %c0_i32 = arith.constant 0 : i32
    %c0_i32_0 = arith.constant 0 : i32
    return %arg0, %c0_i32 : i32, i32
  }
  func.func @transform_1(%arg0: i32) -> (i32, i32) {
    %c0_i32 = arith.constant 0 : i32
    %c0_i32_0 = arith.constant 0 : i32
    %c0_i32_1 = arith.constant 0 : i32
    return %c0_i32, %c0_i32_0 : i32, i32
  }
  func.func @transform_2(%arg0: i32) -> (i32, i32) {
    %c0_i32 = arith.constant 0 : i32
    %c0_i32_0 = arith.constant 0 : i32
    %c0_i32_1 = arith.constant 0 : i32
    return %c0_i32, %c0_i32_0 : i32, i32
  }
  func.func @transform_3(%arg0: i32) -> (i32, i32) {
    %c0_i32 = arith.constant 0 : i32
    %c0_i32_0 = arith.constant 0 : i32
    return %c0_i32, %arg0 : i32, i32
  }
}

</mosaic_0001>

<llo_original>
// kernel: tpu_custom_call.1
$region0: #{tpu_custom_call.1}
  #allocation0 [shape = 'u32[]', space=smem, size = 0x4, offset = 0x4, fixed_abs, tag = 'smem constant byte address 0x4 - core index']
  #allocation1 [shape = 'u32[144,128]{1,0:T(1,128)}', space=vmem, size = 0x12000, scoped, tag = 'internal scratch']
  %s0 = inlined_call_operand.vmem [shape: f32[128,32], index: 0, kind: input, shape index: {}]
  %s1 = inlined_call_operand.vmem [shape: f32[4,32], index: 1, kind: input, shape index: {}]
  %s2 = inlined_call_operand.vmem [shape: f32[4,1], index: 2, kind: input, shape index: {}]
  %s3 = inlined_call_operand.hbm [shape: f32[1,128], index: 3, kind: output, shape index: {}]
  %s4 = sld [smem:[#allocation0]]
  $region22: #{tpu_custom_call.1} parent=0
    _
  %s6 = ssub.s32 1, %s4
  %s7 = scalar_select 0, %s6, %s4
  $region1: #{tpu_custom_call.1} parent=0
    #allocation2 [shape = 'u8[512]{0}', space=vmem, size = 0x400, scoped, tag = 'output window, operand 0, single buffered']
    #allocation3 [shape = 's32[1]{0}', space=sflag, size = 0x4, scoped, tag = 'scoped memory for tpu_custom_call.1']
    %8 = vsyncpa [#allocation3], 0
    // Predicated region
    $region2: #{tpu_custom_call.1} parent=1 // pred_check
      _
    $region3: #{tpu_custom_call.1} parent=1 // pred_check_branch
      %10 = sbr.rel (0) target = $region5
    $region4: #{tpu_custom_call.1} parent=1 // pred_region
      _
    $region5: #{tpu_custom_call.1} parent=1 // pred_fallthru
      _
    // Predicated region
    $region6: #{tpu_custom_call.1} parent=1 // pred_check
      _
    $region7: #{tpu_custom_call.1} parent=1 // pred_check_branch
      %12 = sbr.rel (0) target = $region9
    $region8: #{tpu_custom_call.1} parent=1 // pred_region
      _
    $region9: #{tpu_custom_call.1} parent=1 // pred_fallthru
      _
    // Predicated region
    $region10: #{tpu_custom_call.1} parent=1 // pred_check
      _
    $region11: #{tpu_custom_call.1} parent=1 // pred_check_branch
      %14 = sbr.rel (0) target = $region13
    $region12: #{tpu_custom_call.1} parent=1 // pred_region
      _
    $region13: #{tpu_custom_call.1} parent=1 // pred_fallthru
      _
    %v15 = vld [vmem:[%s1] sm:$0xf]
    %v16 = vld [vmem:[%s0] sm:$0xff]
    %v17 = vld [vmem:[%s0 + $0x8] sm:$0xff]
    %v18 = vld [vmem:[%s0 + $0x10] sm:$0xff]
    %v19 = vld [vmem:[%s0 + $0x18] sm:$0xff]
    %v20 = vld [vmem:[%s0 + $0x20] sm:$0xff]
    %v21 = vld [vmem:[%s0 + $0x28] sm:$0xff]
    %v22 = vld [vmem:[%s0 + $0x30] sm:$0xff]
    %v23 = vld [vmem:[%s0 + $0x38] sm:$0xff]
    %v24 = vld [vmem:[%s0 + $0x40] sm:$0xff]
    %v25 = vld [vmem:[%s0 + $0x48] sm:$0xff]
    %v26 = vld [vmem:[%s0 + $0x50] sm:$0xff]
    %v27 = vld [vmem:[%s0 + $0x58] sm:$0xff]
    %v28 = vld [vmem:[%s0 + $0x60] sm:$0xff]
    %v29 = vld [vmem:[%s0 + $0x68] sm:$0xff]
    %v30 = vld [vmem:[%s0 + $0x70] sm:$0xff]
    %v31 = vld [vmem:[%s0 + $0x78] sm:$0xff]
    %v32 = vld [vmem:[%s2] sm:$0xf]
    %34 = vset.pattern.permute.xlu0 0
    %35 = vperm.xlu0 %34, %v32
    %v36 = vpop.permute.xlu0 %35
    %vm38 = vcmask 261120
    %v40 = vsel %vm38, %v15, 0
    %v43 = vsel %vm38, %v16, 0
    %v46 = vsel %vm38, %v17, 0
    %v49 = vsel %vm38, %v18, 0
    %v52 = vsel %vm38, %v19, 0
    %v55 = vsel %vm38, %v20, 0
    %v58 = vsel %vm38, %v21, 0
    %v61 = vsel %vm38, %v22, 0
    %v64 = vsel %vm38, %v23, 0
    %v67 = vsel %vm38, %v24, 0
    %v70 = vsel %vm38, %v25, 0
    %v73 = vsel %vm38, %v26, 0
    %v76 = vsel %vm38, %v27, 0
    %v79 = vsel %vm38, %v28, 0
    %v82 = vsel %vm38, %v29, 0
    %v85 = vsel %vm38, %v30, 0
    %v88 = vsel %vm38, %v31, 0
    %90 = vmatprep.subr.mxu0 0.0
    %91 = vmatpush1.xpose.msra.mxu0 %v43
    %92 = vmatprep.subr.mxu0 0.0
    %93 = vmatpush1.xpose.msra.mxu0 %v46
    %94 = vmatprep.subr.mxu0 0.0
    %95 = vmatpush1.xpose.msra.mxu0 %v49
    %96 = vmatprep.subr.mxu0 0.0
    %97 = vmatpush1.xpose.msra.mxu0 %v52
    %98 = vmatprep.subr.mxu0 0.0
    %99 = vmatpush1.xpose.msra.mxu0 %v55
    %100 = vmatprep.subr.mxu0 0.0
    %101 = vmatpush1.xpose.msra.mxu0 %v58
    %102 = vmatprep.subr.mxu0 0.0
    %103 = vmatpush1.xpose.msra.mxu0 %v61
    %104 = vmatprep.subr.mxu0 0.0
    %105 = vmatpush1.xpose.msra.mxu0 %v64
    %106 = vmatprep.subr.mxu0 0.0
    %107 = vmatpush1.xpose.msra.mxu0 %v67
    %108 = vmatprep.subr.mxu0 0.0
    %109 = vmatpush1.xpose.msra.mxu0 %v70
    %110 = vmatprep.subr.mxu0 0.0
    %111 = vmatpush1.xpose.msra.mxu0 %v73
    %112 = vmatprep.subr.mxu0 0.0
    %113 = vmatpush1.xpose.msra.mxu0 %v76
    %114 = vmatprep.subr.mxu0 0.0
    %115 = vmatpush1.xpose.msra.mxu0 %v79
    %116 = vmatprep.subr.mxu0 0.0
    %117 = vmatpush1.xpose.msra.mxu0 %v82
    %118 = vmatprep.subr.mxu0 0.0
    %119 = vmatpush1.xpose.msra.mxu0 %v85
    %120 = vmatprep.subr.mxu0 0.0
    %121 = vmatpush1.xpose.msra.mxu0 %v88
    %122 = vmatprep.subr.mxu0 0.0
    %123 = vmatpush1.xpose.msra.mxu0 0.0
    %124 = vmatprep.subr.mxu0 0.0
    %125 = vmatpush1.xpose.msra.mxu0 0.0
    %126 = vmatprep.subr.mxu0 0.0
    %127 = vmatpush1.xpose.msra.mxu0 0.0
    %128 = vmatprep.subr.mxu0 0.0
    %129 = vmatpush1.xpose.msra.mxu0 0.0
    %130 = vmatprep.subr.mxu0 0.0
    %131 = vmatpush1.xpose.msra.mxu0 0.0
    %132 = vmatprep.subr.mxu0 0.0
    %133 = vmatpush1.xpose.msra.mxu0 0.0
    %134 = vmatprep.subr.mxu0 0.0
    %135 = vmatpush1.xpose.msra.mxu0 0.0
    %136 = vmatprep.subr.mxu0 0.0
    %137 = vmatpush1.xpose.msra.mxu0 0.0
    %138 = vmatprep.subr.mxu0 0.0
    %139 = vmatpush1.xpose.msra.mxu0 0.0
    %140 = vmatprep.subr.mxu0 0.0
    %141 = vmatpush1.xpose.msra.mxu0 0.0
    %142 = vmatprep.subr.mxu0 0.0
    %143 = vmatpush1.xpose.msra.mxu0 0.0
    %144 = vmatprep.subr.mxu0 0.0
    %145 = vmatpush1.xpose.msra.mxu0 0.0
    %146 = vmatprep.subr.mxu0 0.0
    %147 = vmatpush1.xpose.msra.mxu0 0.0
    %148 = vmatprep.subr.mxu0 0.0
    %149 = vmatpush1.xpose.msra.mxu0 0.0
    %150 = vmatprep.subr.mxu0 0.0
    %151 = vmatpush1.xpose.msra.mxu0 0.0
    %152 = vmatprep.subr.mxu0 0.0
    %153 = vmatpush1.xpose.msra.mxu0 0.0
    %154 = vmatprep.mubr.f32.mxu0 0.0
    %155 = vmatmul.mubr.f32.gmra.mrb[0].mxu0 %v40
    %v156 = vpop.f32.mrb[0].mxu0
    %v157 = vadd.f32 %v36, %v156
    %v158 = vpop.f32.mrb[0].mxu0
    %159 = vdwg.mxu0
    %vm160 = vcmask 1043456
    %v161 = vsel %vm160, %v157, 0.0
    %v162 = vrot.slane %v161, 4
    %v163 = vadd.f32 %v161, %v162
    %v164 = vrot.slane %v163, 2
    %v165 = vadd.f32 %v163, %v164
    %v166 = vrot.slane %v165, 1
    %v167 = vadd.f32 %v165, %v166
    %v168 = vrcp.pop 4.0
    %v169 = vmul.f32 %v167, %v168
    %170 = vst [vmem:[#allocation2] sm:$0x1] %v169
    // Predicated region
    $region14: #{tpu_custom_call.1} parent=1 // pred_check
      _
    $region15: #{tpu_custom_call.1} parent=1 // pred_check_branch
      %172 = sbr.rel (0) target = $region17
    $region16: #{tpu_custom_call.1} parent=1 // pred_region
      %s174 = ssub.s32 16, 16
      %175 = vsyncadd [#allocation3], %s174
      %s177 = sshll.u32 [#allocation2], 4
      %s178 = int_to_ptr.vmem [resolvable:$true] %s177
      %180 = dma.vmem_to_hbm [thread:$0]  %s178, 16, %s3, [#allocation3]
    $region17: #{tpu_custom_call.1} parent=1 // pred_fallthru
      _
    // Predicated region
    $region18: #{tpu_custom_call.1} parent=1 // pred_check
      _
    $region19: #{tpu_custom_call.1} parent=1 // pred_check_branch
      %182 = sbr.rel (0) target = $region21
    $region20: #{tpu_custom_call.1} parent=1 // pred_region
      %183 = dma.done [#allocation3], 16
    $region21: #{tpu_custom_call.1} parent=1 // pred_fallthru
      _
    %184 = vsyncpa [#allocation3], 1

</llo_original>
